<compile_context>
chip_gen: v7x
topology: tpu7x:2x2x1
jax: 0.10.0
libtpu: 0.0.40
codegen_flags: <defaults>
</compile_context>

<pallas_src>
import functools

import jax
import jax.numpy as jnp
from jax.experimental import pallas as pl
from jax.experimental.pallas import tpu as pltpu


def _attn_kernel(x_ref, wqkv_ref, bqkv_ref, o_ref, *, embed_dim, inv_scale):
    E = embed_dim

    # ---- fused QKV projection: one MXU matmul instead of three -----------------
    # bf16 operands, f32 accumulation (MXU-native); bias add in f32.
    x_bf = x_ref[...].astype(jnp.bfloat16)            # (B, S, E)
    w_bf = wqkv_ref[...].astype(jnp.bfloat16)         # (E, 3E)
    qkv = jnp.einsum(
        "bse,ef->bsf", x_bf, w_bf,
        preferred_element_type=jnp.float32,
    ) + bqkv_ref[...]                                 # (B, S, 3E), f32

    # Slice Q/K/V; fold the 1/sqrt(E) scale into Q (cheaper than scaling (S,S) scores).
    q = qkv[..., 0 * E:1 * E] * inv_scale             # (B, S, E)
    k = qkv[..., 1 * E:2 * E]
    v = qkv[..., 2 * E:3 * E]

    # ---- attention scores: batched q @ k^T, contraction over E -----------------
    # einsum/dot_general contracts the feature dim directly -- no materialized K^T.
    scores = jnp.einsum(
        "bqe,bke->bqk",
        q.astype(jnp.bfloat16), k.astype(jnp.bfloat16),
        preferred_element_type=jnp.float32)           # (B, S, S), f32

    # ---- numerically stable softmax statistics kept in f32 ---------------------
    m = jnp.max(scores, axis=-1, keepdims=True)       # (B, S, 1)
    e = jnp.exp(scores - m)                           # (B, S, S)
    denom = jnp.sum(e, axis=-1, keepdims=True)        # (B, S, 1)

    # ---- unnormalized PV matmul; normalization deferred to the (S, E) output ---
    out_un = jnp.einsum(
        "bqk,bke->bqe",
        e.astype(jnp.bfloat16), v.astype(jnp.bfloat16),
        preferred_element_type=jnp.float32)           # (B, S, E), f32

    # EUP reciprocal (separate issue slot) instead of an O(S^2) divide on the VPU.
    out = out_un * pl.reciprocal(denom, approx=True)
    o_ref[...] = out.astype(o_ref.dtype)


def single_self_attention(x, wq, wk, wv, bq, bk, bv):
    """x: (B, S, E) float32.  wq/wk/wv: (E, E) in (in, out) layout.  b*: (E,)."""
    B, S, E = x.shape
    inv_scale = 1.0 / (float(E) ** 0.5)

    # Fuse the three projections: one (E, 3E) weight and one (1, 3E) bias.
    wqkv = jnp.concatenate([wq, wk, wv], axis=1)          # (E, 3E)
    bqkv = jnp.concatenate([bq, bk, bv]).reshape(1, 3 * E)  # (1, 3E)

    kernel = functools.partial(_attn_kernel, embed_dim=E, inv_scale=inv_scale)

    # Whole problem fits comfortably in VMEM at these shapes -> single grid-less
    # invocation (no per-grid-step pipeline overhead for a 2x8x32 workload).
    # TODO(synk): for large S, tile the query dim with an online-softmax accumulator
    # (flash-style) instead of keeping the full (B, S, S) scores resident.
    vmem = pl.BlockSpec(memory_space=pltpu.MemorySpace.VMEM)

    return pl.pallas_call(
        kernel,
        out_shape=jax.ShapeDtypeStruct((B, S, E), x.dtype),
        in_specs=[vmem, vmem, vmem],
        out_specs=vmem,
    )(x, wqkv, bqkv)


def _reference(x, wq, wk, wv, bq, bk, bv):
    E = x.shape[-1]
    scale = float(E) ** 0.5
    q = x @ wq + bq
    k = x @ wk + bk
    v = x @ wv + bv
    scores = jnp.einsum("bqe,bke->bqk", q, k) / scale
    attn = jax.nn.softmax(scores, axis=-1)
    return jnp.einsum("bqk,bke->bqe", attn, v)


if __name__ == "__main__":
    B, S, E = 2, 8, 32   # batch, seq, embedding_dim

    key = jax.random.PRNGKey(0)
    kx, kq, kk, kv, kbq, kbk, kbv = jax.random.split(key, 7)

    x = jax.random.normal(kx, (B, S, E), dtype=jnp.float32)

    # PyTorch stores W as (out, in) and computes x @ W.T; generate (out, in) then
    # transpose to (in, out) for the kernel's x @ W convention.
    bound = 1.0 / (E ** 0.5)
    wq_pt = jax.random.uniform(kq, (E, E), minval=-bound, maxval=bound, dtype=jnp.float32)
    wk_pt = jax.random.uniform(kk, (E, E), minval=-bound, maxval=bound, dtype=jnp.float32)
    wv_pt = jax.random.uniform(kv, (E, E), minval=-bound, maxval=bound, dtype=jnp.float32)
    bq = jax.random.uniform(kbq, (E,), minval=-bound, maxval=bound, dtype=jnp.float32)
    bk = jax.random.uniform(kbk, (E,), minval=-bound, maxval=bound, dtype=jnp.float32)
    bv = jax.random.uniform(kbv, (E,), minval=-bound, maxval=bound, dtype=jnp.float32)

    wq, wk, wv = wq_pt.T, wk_pt.T, wv_pt.T

    out = single_self_attention(x, wq, wk, wv, bq, bk, bv)
    out = jax.block_until_ready(out)

    ref = _reference(x, wq, wk, wv, bq, bk, bv)
    assert out.shape == (B, S, E)
    # bf16 MXU operands (f32 accumulation) + approx EUP reciprocal: tolerance relaxed
    # from the original 1e-5 f32 check accordingly.
    assert jnp.allclose(out, ref, atol=5e-2, rtol=5e-2), "mismatch vs. JAX reference"

    print("KERNEL_OK")
</pallas_src>

<mosaic_0001>
module attributes {stable_mosaic.version = 11 : i64} {
  func.func @_attn_kernel(%arg0: memref<2x8x32xf32, #tpu.memory_space<vmem>>, %arg1: memref<32x96xf32, #tpu.memory_space<vmem>>, %arg2: memref<1x96xf32, #tpu.memory_space<vmem>>, %arg3: memref<2x8x32xf32, #tpu.memory_space<vmem>>) attributes {dimension_semantics = [], scalar_prefetch = 0 : i64, scratch_operands = 0 : i64, tpu.core_type = #tpu.core_type<tc>} {
    %c0 = arith.constant 0 : index
    %c0_0 = arith.constant 0 : index
    %c0_1 = arith.constant 0 : index
    %0 = vector.load %arg0[%c0, %c0_0, %c0_1] : memref<2x8x32xf32, #tpu.memory_space<vmem>>, vector<2x8x32xf32>
    %1 = arith.truncf %0 : vector<2x8x32xf32> to vector<2x8x32xbf16>
    %c0_2 = arith.constant 0 : index
    %c0_3 = arith.constant 0 : index
    %2 = vector.load %arg1[%c0_2, %c0_3] : memref<32x96xf32, #tpu.memory_space<vmem>>, vector<32x96xf32>
    %3 = arith.truncf %2 : vector<32x96xf32> to vector<32x96xbf16>
    "tpu.trace_start"() <{level = 10 : i32, message = "bse,ef->bsf"}> : () -> ()
    %cst = arith.constant dense<0.000000e+00> : vector<2x8x96xf32>
    %4 = tpu.matmul %1, %3, %cst {dimension_numbers = #tpu.dot_dimension_numbers<[2], [0], [0, 1], [1], [0, 0, 0, 1, 1, 1], [], []>} : vector<2x8x32xbf16>, vector<32x96xbf16>, vector<2x8x96xf32> -> vector<2x8x96xf32>
    "tpu.trace_stop"() : () -> ()
    %c0_4 = arith.constant 0 : index
    %c0_5 = arith.constant 0 : index
    %5 = vector.load %arg2[%c0_4, %c0_5] : memref<1x96xf32, #tpu.memory_space<vmem>>, vector<1x96xf32>
    %6 = vector.shape_cast %5 : vector<1x96xf32> to vector<1x1x96xf32>
    %7 = vector.broadcast %6 : vector<1x1x96xf32> to vector<2x8x96xf32>
    %8 = arith.addf %4, %7 : vector<2x8x96xf32>
    %9 = vector.extract_strided_slice %8 {offsets = [0, 0, 0], sizes = [2, 8, 32], strides = [1, 1, 1]} : vector<2x8x96xf32> to vector<2x8x32xf32>
    %cst_6 = arith.constant 0.176776692 : f32
    %10 = vector.broadcast %cst_6 : f32 to vector<2x8x32xf32>
    %11 = arith.mulf %9, %10 : vector<2x8x32xf32>
    %12 = vector.extract_strided_slice %8 {offsets = [0, 0, 32], sizes = [2, 8, 32], strides = [1, 1, 1]} : vector<2x8x96xf32> to vector<2x8x32xf32>
    %13 = vector.extract_strided_slice %8 {offsets = [0, 0, 64], sizes = [2, 8, 32], strides = [1, 1, 1]} : vector<2x8x96xf32> to vector<2x8x32xf32>
    %14 = arith.truncf %11 : vector<2x8x32xf32> to vector<2x8x32xbf16>
    %15 = arith.truncf %12 : vector<2x8x32xf32> to vector<2x8x32xbf16>
    "tpu.trace_start"() <{level = 10 : i32, message = "bqe,bke->bqk"}> : () -> ()
    %cst_7 = arith.constant dense<0.000000e+00> : vector<2x8x8xf32>
    %16 = tpu.matmul %14, %15, %cst_7 {dimension_numbers = #tpu.dot_dimension_numbers<[2], [2], [1], [1], [0, 0, 0, 1, 1, 1], [0], [0]>} : vector<2x8x32xbf16>, vector<2x8x32xbf16>, vector<2x8x8xf32> -> vector<2x8x8xf32>
    "tpu.trace_stop"() : () -> ()
    %cst_8 = arith.constant dense<0xFF800000> : vector<2x8xf32>
    %17 = vector.multi_reduction <maximumf>, %16, %cst_8 [2] : vector<2x8x8xf32> to vector<2x8xf32>
    %18 = vector.shape_cast %17 : vector<2x8xf32> to vector<2x8x1xf32>
    %19 = vector.broadcast %18 : vector<2x8x1xf32> to vector<2x8x8xf32>
    %20 = arith.subf %16, %19 : vector<2x8x8xf32>
    %21 = math.exp %20 : vector<2x8x8xf32>
    %cst_9 = arith.constant dense<0.000000e+00> : vector<2x8xf32>
    %22 = vector.multi_reduction <add>, %21, %cst_9 [2] : vector<2x8x8xf32> to vector<2x8xf32>
    %23 = vector.shape_cast %22 : vector<2x8xf32> to vector<2x8x1xf32>
    %24 = arith.truncf %21 : vector<2x8x8xf32> to vector<2x8x8xbf16>
    %25 = arith.truncf %13 : vector<2x8x32xf32> to vector<2x8x32xbf16>
    "tpu.trace_start"() <{level = 10 : i32, message = "bqk,bke->bqe"}> : () -> ()
    %cst_10 = arith.constant dense<0.000000e+00> : vector<2x8x32xf32>
    %26 = tpu.matmul %24, %25, %cst_10 {dimension_numbers = #tpu.dot_dimension_numbers<[2], [1], [1], [2], [0, 0, 0, 1, 1, 2], [0], [0]>} : vector<2x8x8xbf16>, vector<2x8x32xbf16>, vector<2x8x32xf32> -> vector<2x8x32xf32>
    "tpu.trace_stop"() : () -> ()
    %27 = tpu.reciprocal %23 {approx = true} : vector<2x8x1xf32> -> vector<2x8x1xf32>
    %28 = vector.broadcast %27 : vector<2x8x1xf32> to vector<2x8x32xf32>
    %29 = arith.mulf %26, %28 : vector<2x8x32xf32>
    %c0_11 = arith.constant 0 : index
    %c0_12 = arith.constant 0 : index
    %c0_13 = arith.constant 0 : index
    %30 = vector.load %arg3[%c0_11, %c0_12, %c0_13] : memref<2x8x32xf32, #tpu.memory_space<vmem>>, vector<2x8x32xf32>
    tpu.vector_store %arg3[%c0_11, %c0_12, %c0_13], %29 {strides = array<i32>} : memref<2x8x32xf32, #tpu.memory_space<vmem>>, vector<2x8x32xf32>,
    return
  }
}

</mosaic_0001>

<llo_original>
// kernel: tpu_custom_call.1
$region0: #{tpu_custom_call.1}
  #allocation0 [shape = 'u32[]', space=smem, size = 0x4, offset = 0x4, fixed_abs, tag = 'smem constant byte address 0x4 - core index']
  #allocation1 [shape = 'u32[144,128]{1,0:T(1,128)}', space=vmem, size = 0x12000, scoped, tag = 'internal scratch']
  %s0 = inlined_call_operand.hbm [shape: f32[2,8,32], index: 0, kind: input, shape index: {}]
  %s1 = inlined_call_operand.hbm [shape: f32[32,96], index: 1, kind: input, shape index: {}]
  %s2 = inlined_call_operand.vmem [shape: f32[1,96], index: 2, kind: input, shape index: {}]
  %s3 = inlined_call_operand.hbm [shape: f32[2,8,32], index: 3, kind: output, shape index: {}]
  %s4 = sld [smem:[#allocation0]]
  $region30: #{tpu_custom_call.1} parent=0
    _
  %s6 = ssub.s32 1, %s4
  %s7 = scalar_select 0, %s6, %s4
  $region1: #{tpu_custom_call.1} parent=0
    #allocation2 [shape = 'u8[8192]{0}', space=vmem, size = 0x2000, scoped, tag = 'input window, operand 0, single buffered']
    #allocation3 [shape = 's32[1]{0}', space=sflag, size = 0x4, scoped, tag = 'scoped memory for tpu_custom_call.1']
    #allocation4 [shape = 's32[1]{0}', space=sflag, size = 0x4, scoped, tag = 'scoped memory for tpu_custom_call.1']
    #allocation5 [shape = 'u8[16384]{0}', space=vmem, size = 0x4000, scoped, tag = 'input window, operand 1, single buffered']
    #allocation6 [shape = 's32[1]{0}', space=sflag, size = 0x4, scoped, tag = 'scoped memory for tpu_custom_call.1']
    #allocation7 [shape = 'u8[8192]{0}', space=vmem, size = 0x2000, scoped, tag = 'output window, operand 0, single buffered']
    %8 = vsyncpa [#allocation3], 0
    %9 = vsyncpa [#allocation6], 0
    %10 = vsyncpa [#allocation4], 0
    // Predicated region
    $region2: #{tpu_custom_call.1} parent=1 // pred_check
      _
    $region3: #{tpu_custom_call.1} parent=1 // pred_check_branch
      %12 = sbr.rel (0) target = $region5
    $region4: #{tpu_custom_call.1} parent=1 // pred_region
      %s14 = ssub.s32 256, 256
      %15 = vsyncadd [#allocation3], %s14
      %s16 = sshll.u32 [#allocation2], 4
      %s17 = int_to_ptr.vmem [resolvable:$true] %s16
      %22 = dma.hbm_to_vmem [thread:$0]  %s0, 256, %s17, [#allocation3], 128, 128, 8
    $region5: #{tpu_custom_call.1} parent=1 // pred_fallthru
      _
    // Predicated region
    $region6: #{tpu_custom_call.1} parent=1 // pred_check
      _
    $region7: #{tpu_custom_call.1} parent=1 // pred_check_branch
      %24 = sbr.rel (0) target = $region9
    $region8: #{tpu_custom_call.1} parent=1 // pred_region
      %s26 = ssub.s32 512, 512
      %27 = vsyncadd [#allocation6], %s26
      %s28 = sshll.u32 [#allocation5], 4
      %s29 = int_to_ptr.vmem [resolvable:$true] %s28
      %34 = dma.hbm_to_vmem [thread:$0]  %s1, 512, %s29, [#allocation6], 128, 128, 8
    $region9: #{tpu_custom_call.1} parent=1 // pred_fallthru
      _
    // Predicated region
    $region10: #{tpu_custom_call.1} parent=1 // pred_check
      _
    $region11: #{tpu_custom_call.1} parent=1 // pred_check_branch
      %36 = sbr.rel (0) target = $region13
    $region12: #{tpu_custom_call.1} parent=1 // pred_region
      _
    $region13: #{tpu_custom_call.1} parent=1 // pred_fallthru
      _
    // Predicated region
    $region14: #{tpu_custom_call.1} parent=1 // pred_check
      _
    $region15: #{tpu_custom_call.1} parent=1 // pred_check_branch
      %38 = sbr.rel (0) target = $region17
    $region16: #{tpu_custom_call.1} parent=1 // pred_region
      %39 = dma.done [#allocation3], 256
    $region17: #{tpu_custom_call.1} parent=1 // pred_fallthru
      _
    // Predicated region
    $region18: #{tpu_custom_call.1} parent=1 // pred_check
      _
    $region19: #{tpu_custom_call.1} parent=1 // pred_check_branch
      %41 = sbr.rel (0) target = $region21
    $region20: #{tpu_custom_call.1} parent=1 // pred_region
      %42 = dma.done [#allocation6], 512
    $region21: #{tpu_custom_call.1} parent=1 // pred_fallthru
      _
    %v44 = vld [vmem:[#allocation2] sm:$0xff]
    %v45 = vld [vmem:[#allocation2 + $0x8] sm:$0xff]
    %v46 = vpack.c.bf16 %v44, %v44
    %v47 = vpack.c.bf16 %v45, %v45
    %v48 = vld [vmem:[#allocation5] sm:$0xff]
    %v49 = vld [vmem:[#allocation5 + $0x8] sm:$0xff]
    %v50 = vld [vmem:[#allocation5 + $0x10] sm:$0xff]
    %v51 = vld [vmem:[#allocation5 + $0x18] sm:$0xff]
    %v52 = vpack.c.bf16 %v49, %v48
    %v53 = vpack.c.bf16 %v51, %v50
    %v54 = vld [vmem:[%s2] sm:$0x1]
    %v56 = vlaneseq
    %v57 = vshrl.u32 %v56, 7
    %v58 = vsub.s32 0, %v57
    %v59 = vrot.slane %v54, %v58
    %v63 = vunpack.c.l.b16 %v46
    %v64 = vunpack.c.l.b16 %v47
    %v65 = vpack.c.b16 %v64, %v63
    %vm66 = vcmask 261120
    %v68 = vsel %vm66, %v65, 0
    %70 = vmatprep.subr.bf16.mxu0 0
    %71 = vmatpush1.bf16.msra.mxu0 %v52
    %72 = vmatprep.subr.bf16.mxu0 0
    %73 = vmatpush1.bf16.msra.mxu0 %v53
    %74 = vmatprep.subr.bf16.mxu0 0
    %75 = vmatpush1.bf16.msra.mxu0 0
    %76 = vmatprep.subr.bf16.mxu0 0
    %77 = vmatpush1.bf16.msra.mxu0 0
    %78 = vmatprep.subr.bf16.mxu0 0
    %79 = vmatpush1.bf16.msra.mxu0 0
    %80 = vmatprep.subr.bf16.mxu0 0
    %81 = vmatpush1.bf16.msra.mxu0 0
    %82 = vmatprep.subr.bf16.mxu0 0
    %83 = vmatpush1.bf16.msra.mxu0 0
    %84 = vmatprep.subr.bf16.mxu0 0
    %85 = vmatpush1.bf16.msra.mxu0 0
    %86 = vmatprep.subr.bf16.mxu0 0
    %87 = vmatpush1.bf16.msra.mxu0 0
    %88 = vmatprep.subr.bf16.mxu0 0
    %89 = vmatpush1.bf16.msra.mxu0 0
    %90 = vmatprep.subr.bf16.mxu0 0
    %91 = vmatpush1.bf16.msra.mxu0 0
    %92 = vmatprep.subr.bf16.mxu0 0
    %93 = vmatpush1.bf16.msra.mxu0 0
    %94 = vmatprep.subr.bf16.mxu0 0
    %95 = vmatpush1.bf16.msra.mxu0 0
    %96 = vmatprep.subr.bf16.mxu0 0
    %97 = vmatpush1.bf16.msra.mxu0 0
    %98 = vmatprep.subr.bf16.mxu0 0
    %99 = vmatpush1.bf16.msra.mxu0 0
    %100 = vmatprep.subr.bf16.mxu0 0
    %101 = vmatpush1.bf16.msra.mxu0 0
    %102 = vmatprep.mubr.bf16.mxu0 0
    %103 = vmatmul.mubr.bf16.gmra.mrb[0].mxu0 %v68
    %v104 = vpop.f32.mrb[0].mxu0
    %v105 = vadd.f32 %v59, %v104
    %v106 = vpop.f32.mrb[0].mxu0
    %v107 = vpop.f32.mrb[0].mxu0
    %v108 = vadd.f32 %v59, %v107
    %v109 = vpop.f32.mrb[0].mxu0
    %110 = vdwg.mxu0
    %v111 = vmul.f32 %v105, 0.17677669
    %v112 = vmul.f32 %v108, 0.17677669
    %v113 = vpack.c.bf16 %v111, %v111
    %v114 = vpack.c.bf16 %v112, %v112
    %v115 = vpack.c.bf16 %v105, %v105
    %v116 = vpack.c.bf16 %v108, %v108
    %118 = vrot.lane.b32.xlu0 %v115, 96
    %v119 = vpop.permute.xlu0 %118
    %v121 = vsel %vm66, %v113, 0
    %v124 = vsel %vm66, %v119, 0
    %126 = vmatprep.subr.bf16.mxu0 0
    %127 = vmatpush1.bf16.xpose.msra.mxu0 %v124
    %128 = vmatprep.subr.bf16.mxu0 0
    %129 = vmatpush1.bf16.xpose.msra.mxu0 0
    %130 = vmatprep.subr.bf16.mxu0 0
    %131 = vmatpush1.bf16.xpose.msra.mxu0 0
    %132 = vmatprep.subr.bf16.mxu0 0
    %133 = vmatpush1.bf16.xpose.msra.mxu0 0
    %134 = vmatprep.subr.bf16.mxu0 0
    %135 = vmatpush1.bf16.xpose.msra.mxu0 0
    %136 = vmatprep.subr.bf16.mxu0 0
    %137 = vmatpush1.bf16.xpose.msra.mxu0 0
    %138 = vmatprep.subr.bf16.mxu0 0
    %139 = vmatpush1.bf16.xpose.msra.mxu0 0
    %140 = vmatprep.subr.bf16.mxu0 0
    %141 = vmatpush1.bf16.xpose.msra.mxu0 0
    %142 = vmatprep.subr.bf16.mxu0 0
    %143 = vmatpush1.bf16.xpose.msra.mxu0 0
    %144 = vmatprep.subr.bf16.mxu0 0
    %145 = vmatpush1.bf16.xpose.msra.mxu0 0
    %146 = vmatprep.subr.bf16.mxu0 0
    %147 = vmatpush1.bf16.xpose.msra.mxu0 0
    %148 = vmatprep.subr.bf16.mxu0 0
    %149 = vmatpush1.bf16.xpose.msra.mxu0 0
    %150 = vmatprep.subr.bf16.mxu0 0
    %151 = vmatpush1.bf16.xpose.msra.mxu0 0
    %152 = vmatprep.subr.bf16.mxu0 0
    %153 = vmatpush1.bf16.xpose.msra.mxu0 0
    %154 = vmatprep.subr.bf16.mxu0 0
    %155 = vmatpush1.bf16.xpose.msra.mxu0 0
    %156 = vmatprep.subr.bf16.mxu0 0
    %157 = vmatpush1.bf16.xpose.msra.mxu0 0
    %158 = vmatprep.mubr.bf16.mxu0 0
    %159 = vmatmul.mubr.bf16.gmra.mrb[0].mxu0 %v121
    %v160 = vpop.f32.mrb[0].mxu0
    %v161 = vadd.f32 0.0, %v160
    %v162 = vpop.f32.mrb[0].mxu0
    %v163 = vpop.f32.mrb[0].mxu0
    %v164 = vpop.f32.mrb[0].mxu0
    %165 = vdwg.mxu0
    %167 = vrot.lane.b32.xlu0 %v116, 96
    %v168 = vpop.permute.xlu0 %167
    %v170 = vsel %vm66, %v114, 0
    %v173 = vsel %vm66, %v168, 0
    %175 = vmatprep.subr.bf16.mxu0 0
    %176 = vmatpush1.bf16.xpose.msra.mxu0 %v173
    %177 = vmatprep.subr.bf16.mxu0 0
    %178 = vmatpush1.bf16.xpose.msra.mxu0 0
    %179 = vmatprep.subr.bf16.mxu0 0
    %180 = vmatpush1.bf16.xpose.msra.mxu0 0
    %181 = vmatprep.subr.bf16.mxu0 0
    %182 = vmatpush1.bf16.xpose.msra.mxu0 0
    %183 = vmatprep.subr.bf16.mxu0 0
    %184 = vmatpush1.bf16.xpose.msra.mxu0 0
    %185 = vmatprep.subr.bf16.mxu0 0
    %186 = vmatpush1.bf16.xpose.msra.mxu0 0
    %187 = vmatprep.subr.bf16.mxu0 0
    %188 = vmatpush1.bf16.xpose.msra.mxu0 0
    %189 = vmatprep.subr.bf16.mxu0 0
    %190 = vmatpush1.bf16.xpose.msra.mxu0 0
    %191 = vmatprep.subr.bf16.mxu0 0
    %192 = vmatpush1.bf16.xpose.msra.mxu0 0
    %193 = vmatprep.subr.bf16.mxu0 0
    %194 = vmatpush1.bf16.xpose.msra.mxu0 0
    %195 = vmatprep.subr.bf16.mxu0 0
    %196 = vmatpush1.bf16.xpose.msra.mxu0 0
    %197 = vmatprep.subr.bf16.mxu0 0
    %198 = vmatpush1.bf16.xpose.msra.mxu0 0
    %199 = vmatprep.subr.bf16.mxu0 0
    %200 = vmatpush1.bf16.xpose.msra.mxu0 0
    %201 = vmatprep.subr.bf16.mxu0 0
    %202 = vmatpush1.bf16.xpose.msra.mxu0 0
    %203 = vmatprep.subr.bf16.mxu0 0
    %204 = vmatpush1.bf16.xpose.msra.mxu0 0
    %205 = vmatprep.subr.bf16.mxu0 0
    %206 = vmatpush1.bf16.xpose.msra.mxu0 0
    %207 = vmatprep.mubr.bf16.mxu0 0
    %208 = vmatmul.mubr.bf16.gmra.mrb[0].mxu0 %v170
    %v209 = vpop.f32.mrb[0].mxu0
    %v210 = vadd.f32 0.0, %v209
    %v211 = vpop.f32.mrb[0].mxu0
    %v212 = vpop.f32.mrb[0].mxu0
    %v213 = vpop.f32.mrb[0].mxu0
    %214 = vdwg.mxu0
    %vm215 = vcmask 64512
    %v216 = vsel %vm215, %v161, -inf
    %217 = vmax.xlane.f32.xlu0 %v216
    %v218 = vpop.xlane.xlu0 %217
    %v219 = vsel %vm215, %v210, -inf
    %220 = vmax.xlane.f32.xlu0 %v219
    %v221 = vpop.xlane.xlu0 %220
    %v222 = vsub.f32 %v161, %v218
    %v223 = vsub.f32 %v210, %v221
    %v224 = vmul.f32 %v222, 1.442695
    %v225 = vpow.pop %v224
    %v226 = vmul.f32 %v223, 1.442695
    %v227 = vpow.pop %v226
    %v228 = vsel %vm215, %v225, 0.0
    %229 = vadd.xlane.f32.xlu0 %v228
    %v230 = vpop.xlane.xlu0 %229
    %v231 = vsel %vm215, %v227, 0.0
    %232 = vadd.xlane.f32.xlu0 %v231
    %v233 = vpop.xlane.xlu0 %232
    %v234 = vpack.c.bf16 %v225, %v225
    %v235 = vpack.c.bf16 %v227, %v227
    %236 = vrot.lane.b32.xlu0 %v115, 64
    %v237 = vpop.permute.xlu0 %236
    %v239 = vsel %vm215, %v234, 0
    %vm241 = vcmask 1043456
    %v243 = vsel %vm241, %v237, 0
    %245 = vmatprep.subr.bf16.mxu0 0
    %246 = vmatpush1.bf16.msra.mxu0 %v243
    %247 = vmatprep.subr.bf16.mxu0 0
    %248 = vmatpush1.bf16.msra.mxu0 0
    %249 = vmatprep.subr.bf16.mxu0 0
    %250 = vmatpush1.bf16.msra.mxu0 0
    %251 = vmatprep.subr.bf16.mxu0 0
    %252 = vmatpush1.bf16.msra.mxu0 0
    %253 = vmatprep.subr.bf16.mxu0 0
    %254 = vmatpush1.bf16.msra.mxu0 0
    %255 = vmatprep.subr.bf16.mxu0 0
    %256 = vmatpush1.bf16.msra.mxu0 0
    %257 = vmatprep.subr.bf16.mxu0 0
    %258 = vmatpush1.bf16.msra.mxu0 0
    %259 = vmatprep.subr.bf16.mxu0 0
    %260 = vmatpush1.bf16.msra.mxu0 0
    %261 = vmatprep.subr.bf16.mxu0 0
    %262 = vmatpush1.bf16.msra.mxu0 0
    %263 = vmatprep.subr.bf16.mxu0 0
    %264 = vmatpush1.bf16.msra.mxu0 0
    %265 = vmatprep.subr.bf16.mxu0 0
    %266 = vmatpush1.bf16.msra.mxu0 0
    %267 = vmatprep.subr.bf16.mxu0 0
    %268 = vmatpush1.bf16.msra.mxu0 0
    %269 = vmatprep.subr.bf16.mxu0 0
    %270 = vmatpush1.bf16.msra.mxu0 0
    %271 = vmatprep.subr.bf16.mxu0 0
    %272 = vmatpush1.bf16.msra.mxu0 0
    %273 = vmatprep.subr.bf16.mxu0 0
    %274 = vmatpush1.bf16.msra.mxu0 0
    %275 = vmatprep.subr.bf16.mxu0 0
    %276 = vmatpush1.bf16.msra.mxu0 0
    %277 = vmatprep.mubr.bf16.mxu0 0
    %278 = vmatmul.mubr.bf16.gmra.mrb[0].mxu0 %v239
    %v279 = vpop.f32.mrb[0].mxu0
    %v280 = vadd.f32 0.0, %v279
    %v281 = vpop.f32.mrb[0].mxu0
    %v282 = vpop.f32.mrb[0].mxu0
    %v283 = vpop.f32.mrb[0].mxu0
    %284 = vdwg.mxu0
    %285 = vrot.lane.b32.xlu0 %v116, 64
    %v286 = vpop.permute.xlu0 %285
    %v288 = vsel %vm215, %v235, 0
    %v291 = vsel %vm241, %v286, 0
    %293 = vmatprep.subr.bf16.mxu0 0
    %294 = vmatpush1.bf16.msra.mxu0 %v291
    %295 = vmatprep.subr.bf16.mxu0 0
    %296 = vmatpush1.bf16.msra.mxu0 0
    %297 = vmatprep.subr.bf16.mxu0 0
    %298 = vmatpush1.bf16.msra.mxu0 0
    %299 = vmatprep.subr.bf16.mxu0 0
    %300 = vmatpush1.bf16.msra.mxu0 0
    %301 = vmatprep.subr.bf16.mxu0 0
    %302 = vmatpush1.bf16.msra.mxu0 0
    %303 = vmatprep.subr.bf16.mxu0 0
    %304 = vmatpush1.bf16.msra.mxu0 0
    %305 = vmatprep.subr.bf16.mxu0 0
    %306 = vmatpush1.bf16.msra.mxu0 0
    %307 = vmatprep.subr.bf16.mxu0 0
    %308 = vmatpush1.bf16.msra.mxu0 0
    %309 = vmatprep.subr.bf16.mxu0 0
    %310 = vmatpush1.bf16.msra.mxu0 0
    %311 = vmatprep.subr.bf16.mxu0 0
    %312 = vmatpush1.bf16.msra.mxu0 0
    %313 = vmatprep.subr.bf16.mxu0 0
    %314 = vmatpush1.bf16.msra.mxu0 0
    %315 = vmatprep.subr.bf16.mxu0 0
    %316 = vmatpush1.bf16.msra.mxu0 0
    %317 = vmatprep.subr.bf16.mxu0 0
    %318 = vmatpush1.bf16.msra.mxu0 0
    %319 = vmatprep.subr.bf16.mxu0 0
    %320 = vmatpush1.bf16.msra.mxu0 0
    %321 = vmatprep.subr.bf16.mxu0 0
    %322 = vmatpush1.bf16.msra.mxu0 0
    %323 = vmatprep.subr.bf16.mxu0 0
    %324 = vmatpush1.bf16.msra.mxu0 0
    %325 = vmatprep.mubr.bf16.mxu0 0
    %326 = vmatmul.mubr.bf16.gmra.mrb[0].mxu0 %v288
    %v327 = vpop.f32.mrb[0].mxu0
    %v328 = vadd.f32 0.0, %v327
    %v329 = vpop.f32.mrb[0].mxu0
    %v330 = vpop.f32.mrb[0].mxu0
    %v331 = vpop.f32.mrb[0].mxu0
    %332 = vdwg.mxu0
    %v333 = vrcp.pop %v230
    %v334 = vrcp.pop %v233
    %v335 = vmul.f32 %v280, %v333
    %v336 = vmul.f32 %v328, %v334
    %337 = vst.msk [vmem:[#allocation7] sm:$0xff] %vm66, %v335
    %338 = vst.msk [vmem:[#allocation7 + $0x8] sm:$0xff] %vm66, %v336
    // Predicated region
    $region22: #{tpu_custom_call.1} parent=1 // pred_check
      _
    $region23: #{tpu_custom_call.1} parent=1 // pred_check_branch
      %340 = sbr.rel (0) target = $region25
    $region24: #{tpu_custom_call.1} parent=1 // pred_region
      %s342 = ssub.s32 256, 256
      %343 = vsyncadd [#allocation4], %s342
      %s344 = sshll.u32 [#allocation7], 4
      %s345 = int_to_ptr.vmem [resolvable:$true] %s344
      %350 = dma.vmem_to_hbm [thread:$0]  %s345, 256, %s3, [#allocation4], 128, 128, 8
    $region25: #{tpu_custom_call.1} parent=1 // pred_fallthru
      _
    // Predicated region
    $region26: #{tpu_custom_call.1} parent=1 // pred_check
      _
    $region27: #{tpu_custom_call.1} parent=1 // pred_check_branch
      %352 = sbr.rel (0) target = $region29
    $region28: #{tpu_custom_call.1} parent=1 // pred_region
      %353 = dma.done [#allocation4], 256
    $region29: #{tpu_custom_call.1} parent=1 // pred_fallthru
      _
    %354 = vsyncpa [#allocation3], 1
    %355 = vsyncpa [#allocation6], 1
    %356 = vsyncpa [#allocation4], 1

</llo_original>
